<compile_context>
chip_gen: v7x
topology: tpu7x:2x2x1
jax: 0.10.0
libtpu: 0.0.40
codegen_flags: <defaults>
</compile_context>

<pallas_src>
import jax
import jax.numpy as jnp
from jax.experimental import pallas as pl
from jax.experimental.pallas import tpu as pltpu


def _round_up(x, m):
    return -(-x // m) * m


def _cdiv(a, b):
    return -(-a // b)


def _inner_product_decoder_kernel(zi_ref, zj_ref, out_ref):
    # zi_ref : (tm, D)        streamed row block of z
    # zj_ref : (tn_or_N, D)   streamed row block / fully resident z
    # out_ref: (tm, tn_or_N)  block of adj = sigmoid(z @ z.T)
    s = jax.lax.dot_general(
        zi_ref[...], zj_ref[...],
        dimension_numbers=(((1,), (1,)), ((), ())),
        preferred_element_type=jnp.float32,
    )
    # sigmoid(x) == 0.5 * tanh(0.5 * x) + 0.5  -> one EUP op per element.
    out_ref[...] = (0.5 * jnp.tanh(0.5 * s) + 0.5).astype(out_ref.dtype)


def _vmem_limit_bytes():
    try:
        info = pltpu.get_tpu_info()
        cap = int(getattr(info, "vmem_capacity_bytes", 64 * 1024 * 1024))
    except Exception:
        cap = 64 * 1024 * 1024  # conservative: v7x per-TC physical VMEM
    # ~48 MiB on v7x (64 MiB physical), ~96 MiB on v5e/v6e (128 MiB physical).
    return min((3 * cap) // 4, 100 * 1024 * 1024)


def inner_product_decoder(z, *, out_dtype=None, compute_dtype=None,
                          force_streamed=False):
    """adj = sigmoid(z @ z.T) via Pallas.  z: (N, D) float array.

    out_dtype / compute_dtype = jnp.bfloat16 roughly halve HBM traffic (the
    kernel is writeback-bound); defaults keep f32 to match PyTorch numerics.
    """
    N, D = z.shape
    if out_dtype is None:
        out_dtype = z.dtype
    if compute_dtype is not None:
        z = z.astype(compute_dtype)  # accumulation stays f32 in-kernel

    in_it = jnp.dtype(z.dtype).itemsize
    out_it = jnp.dtype(out_dtype).itemsize
    align = 16 if in_it == 2 else 8  # bf16 native sublane tile is (16, 128)

    vmem_limit = _vmem_limit_bytes()
    budget = (2 * vmem_limit) // 3   # headroom for compiler-internal scratch
    z_bytes = N * D * in_it

    # ---------- Path A: "column" operand fully resident in VMEM ------------
    tm_a = None
    if not force_streamed:
        avail = budget - 2 * z_bytes             # resident z (double-buffered)
        if avail > 0:
            per_row = 2 * (N * out_it + D * in_it)        # out stripe + zi (x2 bufs)
            tm_cap_vmem = avail // per_row
            tm_cap_stripe = (8 * 1024 * 1024) // max(1, N * out_it)  # <=8 MiB stripe
            tm_cap = (min(tm_cap_vmem, tm_cap_stripe) // align) * align
            if tm_cap >= align:
                # >= 2 row blocks keeps both v7x TensorCores busy; <= ~512 rows each.
                n_blocks = max(2, _cdiv(N, 512))
                tm = _round_up(_cdiv(N, n_blocks), align)
                tm_a = max(align, min(tm, tm_cap, _round_up(N, align)))

    cost = pl.CostEstimate(
        flops=2 * N * N * D,
        transcendentals=N * N,
        bytes_accessed=N * N * out_it + 2 * N * D * in_it,
    )

    if tm_a is not None:
        tm = tm_a
        n_row_blocks = _cdiv(N, tm)
        n_pad = n_row_blocks * tm
        # Zero-pad only the streamed row operand so full blocks read defined data;
        # padded rows only ever land in the masked tail of the last output block.
        zi = z if n_pad == N else jnp.pad(z, ((0, n_pad - N), (0, 0)))
        grid = (n_row_blocks,)
        in_specs = [
            pl.BlockSpec((tm, D), lambda i: (i, 0)),   # streamed row block
            pl.BlockSpec((N, D), lambda i: (0, 0)),    # resident full z (DMA'd once)
        ]
        out_specs = pl.BlockSpec((tm, N), lambda i: (i, 0))  # lane-dense full-width stripe
        dim_sem = ("parallel",)
        operands = (zi, z)
    else:
        # -------- Path B: both operands streamed, wide lane-dense out tiles --
        tm, tn = 256, 1024

        def fits(tm_, tn_):
            return (2 * tm_ * D * in_it + 2 * tn_ * D * in_it
                    + 2 * tm_ * tn_ * out_it) <= budget

        while not fits(tm, tn) and tn > 512:
            tn //= 2
        while not fits(tm, tn) and tm > 128:
            tm //= 2
        while not fits(tm, tn) and tn > 128:
            tn //= 2
        tm = min(tm, _round_up(N, align))
        tn = min(tn, _round_up(N, 128))
        n_pad = max(_cdiv(N, tm) * tm, _cdiv(N, tn) * tn)
        zi = z if n_pad == N else jnp.pad(z, ((0, n_pad - N), (0, 0)))
        grid = (_cdiv(N, tm), _cdiv(N, tn))
        in_specs = [
            pl.BlockSpec((tm, D), lambda i, j: (i, 0)),
            pl.BlockSpec((tn, D), lambda i, j: (j, 0)),
        ]
        out_specs = pl.BlockSpec((tm, tn), lambda i, j: (i, j))
        dim_sem = ("parallel", "parallel")
        operands = (zi, zi)

    adj = pl.pallas_call(
        _inner_product_decoder_kernel,
        out_shape=jax.ShapeDtypeStruct((N, N), out_dtype),   # exact shape: no post-slice
        grid_spec=pltpu.PrefetchScalarGridSpec(
            num_scalar_prefetch=0,
            grid=grid,
            in_specs=in_specs,
            out_specs=out_specs,
        ),
        compiler_params=pltpu.CompilerParams(
            dimension_semantics=dim_sem,
            vmem_limit_bytes=int(vmem_limit),
        ),
        cost_estimate=cost,
    )(*operands)
    return adj


if __name__ == "__main__":
    key = jax.random.PRNGKey(0)

    # Shapes implied by the module (GAE decoder): nodes N = 8, latent dim D = 32.
    N, D = 8, 32
    z = jax.random.normal(key, (N, D), dtype=jnp.float32)
    adj = jax.block_until_ready(inner_product_decoder(z))
    ref = jax.nn.sigmoid(z @ z.T)
    assert adj.shape == (N, N)
    assert jnp.allclose(adj, ref, atol=1e-5, rtol=1e-5), "mismatch (small case)"

    # Non-tile-multiple N: exercises exact-(N,N) output + masked partial stores (Path A).
    N2 = 600
    z2 = jax.random.normal(jax.random.PRNGKey(0), (N2, D), dtype=jnp.float32)
    adj2 = jax.block_until_ready(inner_product_decoder(z2))
    ref2 = jax.nn.sigmoid(z2 @ z2.T)
    assert adj2.shape == (N2, N2)
    assert jnp.allclose(adj2, ref2, atol=5e-5, rtol=1e-5), "mismatch (path A)"

    # Force the fully streamed 2-D tiled path (Path B).
    adj3 = jax.block_until_ready(inner_product_decoder(z2, force_streamed=True))
    assert adj3.shape == (N2, N2)
    assert jnp.allclose(adj3, ref2, atol=5e-5, rtol=1e-5), "mismatch (path B)"

    # Recommended low-traffic variant for this writeback-bound op: bf16 output.
    adj4 = jax.block_until_ready(inner_product_decoder(z2, out_dtype=jnp.bfloat16))
    assert adj4.dtype == jnp.bfloat16
    assert jnp.allclose(adj4.astype(jnp.float32), ref2, atol=1e-2), "mismatch (bf16 out)"

    print("KERNEL_OK")
</pallas_src>

<mosaic_0001>
module attributes {stable_mosaic.version = 11 : i64} {
  func.func @_inner_product_decoder_kernel(%arg0: i32, %arg1: memref<8x32xf32, #tpu.memory_space<vmem>>, %arg2: memref<8x32xf32, #tpu.memory_space<vmem>>, %arg3: memref<8x8xf32, #tpu.memory_space<vmem>>) attributes {dimension_semantics = [#tpu.dimension_semantics<parallel>], iteration_bounds = array<i64: 1>, scalar_prefetch = 0 : i64, scratch_operands = 0 : i64, tpu.core_type = #tpu.core_type<tc>, window_params = [{transform_indices = @transform_0, window_bounds = array<i64: 8, 32>}, {pipeline_mode = #tpu.pipeline_mode<synchronous>, transform_indices = @transform_1, window_bounds = array<i64: 8, 32>}, {transform_indices = @transform_2, window_bounds = array<i64: 8, 8>}]} {
    %c0 = arith.constant 0 : index
    %c0_0 = arith.constant 0 : index
    %0 = vector.load %arg1[%c0, %c0_0] : memref<8x32xf32, #tpu.memory_space<vmem>>, vector<8x32xf32>
    %c0_1 = arith.constant 0 : index
    %c0_2 = arith.constant 0 : index
    %1 = vector.load %arg2[%c0_1, %c0_2] : memref<8x32xf32, #tpu.memory_space<vmem>>, vector<8x32xf32>
    %cst = arith.constant dense<0.000000e+00> : vector<8x8xf32>
    %2 = tpu.matmul %0, %1, %cst {dimension_numbers = #tpu.dot_dimension_numbers<[1], [1], [0], [0], [0, 0, 1, 0], [], []>} : vector<8x32xf32>, vector<8x32xf32>, vector<8x8xf32> -> vector<8x8xf32>
    %cst_3 = arith.constant 5.000000e-01 : f32
    %3 = vector.broadcast %cst_3 : f32 to vector<8x8xf32>
    %4 = arith.mulf %3, %2 : vector<8x8xf32>
    %5 = math.tanh %4 : vector<8x8xf32>
    %cst_4 = arith.constant 5.000000e-01 : f32
    %6 = vector.broadcast %cst_4 : f32 to vector<8x8xf32>
    %7 = arith.mulf %6, %5 : vector<8x8xf32>
    %cst_5 = arith.constant 5.000000e-01 : f32
    %8 = vector.broadcast %cst_5 : f32 to vector<8x8xf32>
    %9 = arith.addf %7, %8 : vector<8x8xf32>
    %c0_6 = arith.constant 0 : index
    %c0_7 = arith.constant 0 : index
    %10 = vector.load %arg3[%c0_6, %c0_7] : memref<8x8xf32, #tpu.memory_space<vmem>>, vector<8x8xf32>
    tpu.vector_store %arg3[%c0_6, %c0_7], %9 {strides = array<i32>} : memref<8x8xf32, #tpu.memory_space<vmem>>, vector<8x8xf32>,
    return
  }
  func.func @transform_0(%arg0: i32) -> (i32, i32) {
    %c0_i32 = arith.constant 0 : i32
    %c0_i32_0 = arith.constant 0 : i32
    return %arg0, %c0_i32 : i32, i32
  }
  func.func @transform_1(%arg0: i32) -> (i32, i32) {
    %c0_i32 = arith.constant 0 : i32
    %c0_i32_0 = arith.constant 0 : i32
    %c0_i32_1 = arith.constant 0 : i32
    return %c0_i32, %c0_i32_0 : i32, i32
  }
  func.func @transform_2(%arg0: i32) -> (i32, i32) {
    %c0_i32 = arith.constant 0 : i32
    %c0_i32_0 = arith.constant 0 : i32
    return %arg0, %c0_i32 : i32, i32
  }
}

</mosaic_0001>

<llo_original>
// kernel: tpu_custom_call.1
$region0: #{tpu_custom_call.1}
  #allocation0 [shape = 'u32[]', space=smem, size = 0x4, offset = 0x4, fixed_abs, tag = 'smem constant byte address 0x4 - core index']
  #allocation1 [shape = 'u32[144,128]{1,0:T(1,128)}', space=vmem, size = 0x12000, scoped, tag = 'internal scratch']
  %s0 = inlined_call_operand.hbm [shape: f32[8,32], index: 0, kind: input, shape index: {}]
  %s1 = inlined_call_operand.hbm [shape: f32[8,32], index: 1, kind: input, shape index: {}]
  %s2 = inlined_call_operand.hbm [shape: f32[8,8], index: 2, kind: output, shape index: {}]
  %s3 = sld [smem:[#allocation0]]
  $region26: #{tpu_custom_call.1} parent=0
    _
  %s5 = ssub.s32 1, %s3
  %s6 = scalar_select 0, %s5, %s3
  $region1: #{tpu_custom_call.1} parent=0
    #allocation2 [shape = 'u8[4096]{0}', space=vmem, size = 0x1000, scoped, tag = 'input window, operand 0, single buffered']
    #allocation3 [shape = 's32[1]{0}', space=sflag, size = 0x4, scoped, tag = 'scoped memory for tpu_custom_call.1']
    #allocation4 [shape = 's32[1]{0}', space=sflag, size = 0x4, scoped, tag = 'scoped memory for tpu_custom_call.1']
    #allocation5 [shape = 'u8[4096]{0}', space=vmem, size = 0x1000, scoped, tag = 'input window, operand 1, single buffered']
    #allocation6 [shape = 's32[1]{0}', space=sflag, size = 0x4, scoped, tag = 'scoped memory for tpu_custom_call.1']
    #allocation7 [shape = 'u8[4096]{0}', space=vmem, size = 0x1000, scoped, tag = 'output window, operand 0, single buffered']
    %7 = vsyncpa [#allocation3], 0
    %8 = vsyncpa [#allocation6], 0
    %9 = vsyncpa [#allocation4], 0
    // Predicated region
    $region2: #{tpu_custom_call.1} parent=1 // pred_check
      _
    $region3: #{tpu_custom_call.1} parent=1 // pred_check_branch
      %11 = sbr.rel (0) target = $region5
    $region4: #{tpu_custom_call.1} parent=1 // pred_region
      %s13 = ssub.s32 128, 128
      %14 = vsyncadd [#allocation3], %s13
      %s16 = sshll.u32 [#allocation2], 4
      %s17 = int_to_ptr.vmem [resolvable:$true] %s16
      %19 = dma.hbm_to_vmem [thread:$0]  %s0, 128, %s17, [#allocation3]
    $region5: #{tpu_custom_call.1} parent=1 // pred_fallthru
      _
    // Predicated region
    $region6: #{tpu_custom_call.1} parent=1 // pred_check
      _
    $region7: #{tpu_custom_call.1} parent=1 // pred_check_branch
      %21 = sbr.rel (0) target = $region9
    $region8: #{tpu_custom_call.1} parent=1 // pred_region
      %s23 = ssub.s32 128, 128
      %24 = vsyncadd [#allocation6], %s23
      %s26 = sshll.u32 [#allocation5], 4
      %s27 = int_to_ptr.vmem [resolvable:$true] %s26
      %29 = dma.hbm_to_vmem [thread:$0]  %s1, 128, %s27, [#allocation6]
    $region9: #{tpu_custom_call.1} parent=1 // pred_fallthru
      _
    // Predicated region
    $region10: #{tpu_custom_call.1} parent=1 // pred_check
      _
    $region11: #{tpu_custom_call.1} parent=1 // pred_check_branch
      %31 = sbr.rel (0) target = $region13
    $region12: #{tpu_custom_call.1} parent=1 // pred_region
      %32 = dma.done [#allocation3], 128
    $region13: #{tpu_custom_call.1} parent=1 // pred_fallthru
      _
    // Predicated region
    $region14: #{tpu_custom_call.1} parent=1 // pred_check
      _
    $region15: #{tpu_custom_call.1} parent=1 // pred_check_branch
      %34 = sbr.rel (0) target = $region17
    $region16: #{tpu_custom_call.1} parent=1 // pred_region
      %35 = dma.done [#allocation6], 128
    $region17: #{tpu_custom_call.1} parent=1 // pred_fallthru
      _
    %v36 = vld [vmem:[#allocation2] sm:$0xff]
    %v37 = vld [vmem:[#allocation5] sm:$0xff]
    %vm38 = vcmask 261120
    %v40 = vsel %vm38, %v36, 0
    %v43 = vsel %vm38, %v37, 0
    %45 = vmatprep.subr.mxu0 0.0
    %46 = vmatpush1.xpose.msra.mxu0 %v43
    %47 = vmatprep.subr.mxu0 0.0
    %48 = vmatpush1.xpose.msra.mxu0 0.0
    %49 = vmatprep.subr.mxu0 0.0
    %50 = vmatpush1.xpose.msra.mxu0 0.0
    %51 = vmatprep.subr.mxu0 0.0
    %52 = vmatpush1.xpose.msra.mxu0 0.0
    %53 = vmatprep.subr.mxu0 0.0
    %54 = vmatpush1.xpose.msra.mxu0 0.0
    %55 = vmatprep.subr.mxu0 0.0
    %56 = vmatpush1.xpose.msra.mxu0 0.0
    %57 = vmatprep.subr.mxu0 0.0
    %58 = vmatpush1.xpose.msra.mxu0 0.0
    %59 = vmatprep.subr.mxu0 0.0
    %60 = vmatpush1.xpose.msra.mxu0 0.0
    %61 = vmatprep.subr.mxu0 0.0
    %62 = vmatpush1.xpose.msra.mxu0 0.0
    %63 = vmatprep.subr.mxu0 0.0
    %64 = vmatpush1.xpose.msra.mxu0 0.0
    %65 = vmatprep.subr.mxu0 0.0
    %66 = vmatpush1.xpose.msra.mxu0 0.0
    %67 = vmatprep.subr.mxu0 0.0
    %68 = vmatpush1.xpose.msra.mxu0 0.0
    %69 = vmatprep.subr.mxu0 0.0
    %70 = vmatpush1.xpose.msra.mxu0 0.0
    %71 = vmatprep.subr.mxu0 0.0
    %72 = vmatpush1.xpose.msra.mxu0 0.0
    %73 = vmatprep.subr.mxu0 0.0
    %74 = vmatpush1.xpose.msra.mxu0 0.0
    %75 = vmatprep.subr.mxu0 0.0
    %76 = vmatpush1.xpose.msra.mxu0 0.0
    %77 = vmatprep.subr.mxu0 0.0
    %78 = vmatpush1.xpose.msra.mxu0 0.0
    %79 = vmatprep.subr.mxu0 0.0
    %80 = vmatpush1.xpose.msra.mxu0 0.0
    %81 = vmatprep.subr.mxu0 0.0
    %82 = vmatpush1.xpose.msra.mxu0 0.0
    %83 = vmatprep.subr.mxu0 0.0
    %84 = vmatpush1.xpose.msra.mxu0 0.0
    %85 = vmatprep.subr.mxu0 0.0
    %86 = vmatpush1.xpose.msra.mxu0 0.0
    %87 = vmatprep.subr.mxu0 0.0
    %88 = vmatpush1.xpose.msra.mxu0 0.0
    %89 = vmatprep.subr.mxu0 0.0
    %90 = vmatpush1.xpose.msra.mxu0 0.0
    %91 = vmatprep.subr.mxu0 0.0
    %92 = vmatpush1.xpose.msra.mxu0 0.0
    %93 = vmatprep.subr.mxu0 0.0
    %94 = vmatpush1.xpose.msra.mxu0 0.0
    %95 = vmatprep.subr.mxu0 0.0
    %96 = vmatpush1.xpose.msra.mxu0 0.0
    %97 = vmatprep.subr.mxu0 0.0
    %98 = vmatpush1.xpose.msra.mxu0 0.0
    %99 = vmatprep.subr.mxu0 0.0
    %100 = vmatpush1.xpose.msra.mxu0 0.0
    %101 = vmatprep.subr.mxu0 0.0
    %102 = vmatpush1.xpose.msra.mxu0 0.0
    %103 = vmatprep.subr.mxu0 0.0
    %104 = vmatpush1.xpose.msra.mxu0 0.0
    %105 = vmatprep.subr.mxu0 0.0
    %106 = vmatpush1.xpose.msra.mxu0 0.0
    %107 = vmatprep.subr.mxu0 0.0
    %108 = vmatpush1.xpose.msra.mxu0 0.0
    %109 = vmatprep.mubr.f32.mxu0 0.0
    %110 = vmatmul.mubr.f32.gmra.mrb[0].mxu0 %v40
    %v111 = vpop.f32.mrb[0].mxu0
    %v112 = vadd.f32 0.0, %v111
    %v113 = vpop.f32.mrb[0].mxu0
    %114 = vdwg.mxu0
    %v115 = vmul.f32 %v112, 0.5
    %v116 = vtanh.pop %v115
    %v117 = vmul.f32 %v116, 0.5
    %v118 = vadd.f32 %v117, 0.5
    %vm119 = vcmask 64512
    %120 = vst.msk [vmem:[#allocation7] sm:$0xff] %vm119, %v118
    // Predicated region
    $region18: #{tpu_custom_call.1} parent=1 // pred_check
      _
    $region19: #{tpu_custom_call.1} parent=1 // pred_check_branch
      %122 = sbr.rel (0) target = $region21
    $region20: #{tpu_custom_call.1} parent=1 // pred_region
      %s124 = ssub.s32 128, 128
      %125 = vsyncadd [#allocation4], %s124
      %s127 = sshll.u32 [#allocation7], 4
      %s128 = int_to_ptr.vmem [resolvable:$true] %s127
      %130 = dma.vmem_to_hbm [thread:$0]  %s128, 128, %s2, [#allocation4]
    $region21: #{tpu_custom_call.1} parent=1 // pred_fallthru
      _
    // Predicated region
    $region22: #{tpu_custom_call.1} parent=1 // pred_check
      _
    $region23: #{tpu_custom_call.1} parent=1 // pred_check_branch
      %132 = sbr.rel (0) target = $region25
    $region24: #{tpu_custom_call.1} parent=1 // pred_region
      %133 = dma.done [#allocation4], 128
    $region25: #{tpu_custom_call.1} parent=1 // pred_fallthru
      _
    %134 = vsyncpa [#allocation3], 1
    %135 = vsyncpa [#allocation6], 1
    %136 = vsyncpa [#allocation4], 1

</llo_original>
